<compile_context>
chip_gen: v5e
topology: v5e:2x2
jax: 0.10.0
libtpu: 0.0.40
codegen_flags: <defaults>
</compile_context>

<pallas_src>
import functools
import math

import jax
import jax.numpy as jnp
from jax.experimental import pallas as pl
from jax.experimental.pallas import tpu as pltpu


# ----------------------------- small helpers ------------------------------- #

def _round_up(x, m):
    return ((x + m - 1) // m) * m


def _cdiv(a, b):
    return (a + b - 1) // b


def _choose_tile(size, align, target):
    """Pick (tile, padded) with tile % align == 0, padded % tile == 0,
    padded >= size, tile <= ~target; minimize zero-padding, then grid steps."""
    aligned = _round_up(size, align)
    target = max(align, min(target, aligned))
    n_min = _cdiv(aligned, target)
    n_max = min(n_min + 64, _cdiv(aligned, align))
    best = None
    for n in range(n_min, n_max + 1):
        tile = _round_up(_cdiv(aligned, n), align)
        if n > n_min and tile > target:
            continue
        padded = tile * n
        key = (padded - size, n)  # waste first, then fewer grid steps
        if best is None or key < best[0]:
            best = (key, tile, padded)
    _, tile, padded = best
    return tile, padded


def _footprint(tm, tk, tn, w_bufs=2):
    """Approx. VMEM bytes: 2x-buffered X/out/bias tiles, w_bufs-buffered W tile,
    plus the f32 accumulator. All f32."""
    return 4 * (2 * tm * tk + w_bufs * tk * tn + 2 * tm * tn + tm * tn + 2 * tn)


def _vmem_budget_and_limit():
    """Per-generation VMEM budget (for tile sizing) and vmem_limit_bytes."""
    cap = 0
    try:
        cap = int(getattr(pltpu.get_tpu_info(), "vmem_capacity_bytes", 0) or 0)
    except Exception:
        cap = 0
    if cap <= 0:
        cap = 64 * 1024 * 1024  # conservative fallback (v7x per-TC VMEM)
    limit = max(32 << 20, min((cap * 3) // 4, cap - (8 << 20)))
    budget = max(8 << 20, min((cap * 6) // 10, limit - (4 << 20)))
    return budget, limit


def _select_tiles(batch, input_dim, output_dim, vmem_budget,
                  tm_hint=None, tk_hint=None, tn_hint=None):
    m_aligned = _round_up(batch, 8)
    k_aligned = _round_up(input_dim, 128)
    small_batch = m_aligned <= 128

    # Targets: small-batch path collapses M (and K if it fits) and widens N so
    # W is streamed once with the fewest grid steps; large path targets 512/2048.
    tm_t = tm_hint or (m_aligned if small_batch else 512)
    tk_t = tk_hint or (k_aligned if small_batch else 2048)
    tn_t = tn_hint or (1024 if small_batch else 512)

    while True:
        tm, m_pad = _choose_tile(batch, 8, tm_t)
        tk, k_pad = _choose_tile(input_dim, 128, tk_t)
        tn, n_pad = _choose_tile(output_dim, 128, tn_t)
        if _footprint(tm, tk, tn) <= vmem_budget:
            break
        if max(tm_t, tk_t, tn_t) <= 128:
            break  # minimal tiles; tiny footprint, accept
        if tk_t >= tn_t and tk_t >= tm_t and tk_t > 128:
            tk_t = max(128, tk_t // 2)
        elif tn_t >= tm_t and tn_t > 128:
            tn_t = max(128, tn_t // 2)
        else:
            tm_t = max(8, tm_t // 2)

    # v7x: make sure a "parallel" grid axis has >= 2 blocks when N allows, so
    # both TensorCores get work. Nearly free on single-TC v5e/v6e.
    if (m_pad // tm) * (n_pad // tn) == 1 and n_pad >= 256 and tn_hint is None:
        half = max(128, ((n_pad // 2) // 128) * 128)
        tn2, n_pad2 = _choose_tile(output_dim, 128, half)
        if n_pad2 // tn2 >= 2:
            tn, n_pad = tn2, n_pad2

    return (tm, tk, tn), (m_pad, k_pad, n_pad), small_batch


# --------------------------------- kernel ---------------------------------- #

def _blank_layer_kernel(x_ref, w_ref, b_ref, o_ref, acc_ref, *, inv_sqrt_in):
    k = pl.program_id(2)

    @pl.when(k == 0)
    def _init():
        acc_ref[...] = jnp.zeros_like(acc_ref)

    # MXU matmul into the f32 accumulator; W is NOT pre-scaled (scale fused below).
    acc_ref[...] += jnp.dot(
        x_ref[...], w_ref[...], preferred_element_type=jnp.float32
    )

    @pl.when(k == pl.num_programs(2) - 1)
    def _finalize():
        # Scale the (tm, tn) accumulator once, add bias once, store lane-dense.
        o_ref[...] = (acc_ref[...] * inv_sqrt_in + b_ref[...]).astype(o_ref.dtype)


# -------------------------------- wrapper ----------------------------------- #

def blank_layer_forward(x, W, b, *, tm=None, tn=None, tk=None):
    """x: (B, in_dim) f32, W: (in_dim, out_dim) f32, b: (out_dim,) f32."""
    batch, input_dim = x.shape
    in_dim_w, output_dim = W.shape
    assert in_dim_w == input_dim
    assert b.shape == (output_dim,)

    vmem_budget, vmem_limit = _vmem_budget_and_limit()
    (tm_, tk_, tn_), (m_pad, k_pad, n_pad), small_batch = _select_tiles(
        batch, input_dim, output_dim, vmem_budget, tm, tk, tn)

    # Python float -> baked into the kernel as a literal (no captured constant).
    inv_sqrt_in = 1.0 / math.sqrt(input_dim)
    kernel = functools.partial(_blank_layer_kernel, inv_sqrt_in=inv_sqrt_in)

    # Pad only when needed (zero K-padding contributes exactly 0 to the dot;
    # padded N columns / M rows are sliced off below only if they exist).
    x_p = x if (m_pad == batch and k_pad == input_dim) else jnp.pad(
        x, ((0, m_pad - batch), (0, k_pad - input_dim)))
    w_p = W if (k_pad == input_dim and n_pad == output_dim) else jnp.pad(
        W, ((0, k_pad - input_dim), (0, n_pad - output_dim)))
    b2 = b.reshape(1, output_dim)
    b_p = b2 if n_pad == output_dim else jnp.pad(
        b2, ((0, 0), (0, n_pad - output_dim)))

    m_blocks, n_blocks, k_blocks = m_pad // tm_, n_pad // tn_, k_pad // tk_
    grid = (m_blocks, n_blocks, k_blocks)

    # Actual HBM traffic: X re-read per N block, W re-read per M block,
    # bias re-fetched per (M, N) block, output written once.
    bytes_accessed = 4 * (m_pad * k_pad * n_blocks
                          + k_pad * n_pad * m_blocks
                          + m_pad * n_pad
                          + n_pad * m_blocks)
    flops = 2 * m_pad * k_pad * n_pad

    x_spec = pl.BlockSpec((tm_, tk_), lambda i, j, k: (i, k))
    b_spec = pl.BlockSpec((1, tn_), lambda i, j, k: (0, j))
    out_spec = pl.BlockSpec((tm_, tn_), lambda i, j, k: (i, j))

    def make_w_spec(buffers):
        if buffers > 2 and hasattr(pl, "Buffered"):
            try:
                return pl.BlockSpec((tk_, tn_), lambda i, j, k: (k, j),
                                    pipeline_mode=pl.Buffered(buffers))
            except TypeError:
                pass  # pipeline_mode not supported by this BlockSpec signature
        return pl.BlockSpec((tk_, tn_), lambda i, j, k: (k, j))

    # Small-M regime is W-DMA bound: triple-buffer W if it still fits VMEM.
    w_bufs = 3 if (small_batch
                   and _footprint(tm_, tk_, tn_, w_bufs=3) <= vmem_budget) else 2

    def run(wspec):
        return pl.pallas_call(
            kernel,
            out_shape=jax.ShapeDtypeStruct((m_pad, n_pad), x.dtype),
            grid=grid,
            in_specs=[x_spec, wspec, b_spec],
            out_specs=out_spec,
            scratch_shapes=[pltpu.VMEM((tm_, tn_), jnp.float32)],
            compiler_params=pltpu.CompilerParams(
                dimension_semantics=("parallel", "parallel", "arbitrary"),
                vmem_limit_bytes=vmem_limit,
            ),
            cost_estimate=pl.CostEstimate(
                flops=flops, bytes_accessed=bytes_accessed, transcendentals=0),
        )(x_p, w_p, b_p)

    if w_bufs > 2:
        try:
            out_p = run(make_w_spec(3))
        except Exception:
            # Fallback if deeper pipelining is rejected by this JAX/Mosaic build.
            out_p = run(make_w_spec(2))
    else:
        out_p = run(make_w_spec(2))

    if m_pad == batch and n_pad == output_dim:
        return out_p
    return out_p[:batch, :output_dim]


# ---------------------------------- test ------------------------------------ #

if __name__ == "__main__":
    key = jax.random.PRNGKey(0)
    kx, kw, kx2, kw2, kb2 = jax.random.split(key, 5)

    # Case 1: small shapes matching the module init (W ~ N(0,1), b = 0).
    # Exercises the small-batch fast path (grid collapsed to a single step).
    batch, input_dim, output_dim = 8, 32, 16
    x = jax.random.normal(kx, (batch, input_dim), dtype=jnp.float32)
    W = jax.random.normal(kw, (input_dim, output_dim), dtype=jnp.float32)
    b = jnp.zeros((output_dim,), dtype=jnp.float32)

    out = jax.block_until_ready(blank_layer_forward(x, W, b))
    ref = x @ (W / math.sqrt(input_dim)) + b
    assert out.shape == (batch, output_dim)
    assert jnp.allclose(out, ref, atol=1e-5, rtol=1e-5)

    # Case 2: aligned shapes + forced small tk -> multi-block K accumulation,
    # >=2 N blocks, and the no-pad / no-slice fast path.
    b2n, i2, o2 = 160, 384, 256
    x2 = jax.random.normal(kx2, (b2n, i2), dtype=jnp.float32)
    W2 = jax.random.normal(kw2, (i2, o2), dtype=jnp.float32)
    bias2 = jax.random.normal(kb2, (o2,), dtype=jnp.float32)

    out2 = jax.block_until_ready(blank_layer_forward(x2, W2, bias2, tk=128))
    ref2 = x2 @ (W2 / math.sqrt(i2)) + bias2
    assert out2.shape == (b2n, o2)
    assert jnp.allclose(out2, ref2, atol=1e-3, rtol=1e-3)

    print("KERNEL_OK")
</pallas_src>

<mosaic_0001>
module attributes {stable_mosaic.version = 11 : i64} {
  func.func @_blank_layer_kernel(%arg0: i32, %arg1: i32, %arg2: i32, %arg3: memref<8x128xf32, #tpu.memory_space<vmem>>, %arg4: memref<128x128xf32, #tpu.memory_space<vmem>>, %arg5: memref<1x128xf32, #tpu.memory_space<vmem>>, %arg6: memref<8x128xf32, #tpu.memory_space<vmem>>, %arg7: memref<8x128xf32, #tpu.memory_space<vmem>>) attributes {dimension_semantics = [#tpu.dimension_semantics<parallel>, #tpu.dimension_semantics<parallel>, #tpu.dimension_semantics<arbitrary>], iteration_bounds = array<i64: 1, 1, 1>, scalar_prefetch = 0 : i64, scratch_operands = 1 : i64, tpu.core_type = #tpu.core_type<tc>, window_params = [{transform_indices = @transform_0, window_bounds = array<i64: 8, 128>}, {transform_indices = @transform_1, window_bounds = array<i64: 128, 128>}, {transform_indices = @transform_2, window_bounds = array<i64: 1, 128>}, {transform_indices = @transform_3, window_bounds = array<i64: 8, 128>}]} {
    %c0_i32 = arith.constant 0 : i32
    %0 = arith.cmpi eq, %arg2, %c0_i32 : i32
    %1 = arith.extui %0 : i1 to i32
    %c0_i32_0 = arith.constant 0 : i32
    %2 = arith.cmpi ne, %1, %c0_i32_0 : i32
    scf.if %2 {
      %cst_10 = arith.constant 0.000000e+00 : f32
      %12 = vector.broadcast %cst_10 : f32 to vector<8x128xf32>
      %c0_11 = arith.constant 0 : index
      %c0_12 = arith.constant 0 : index
      %13 = vector.load %arg7[%c0_11, %c0_12] : memref<8x128xf32, #tpu.memory_space<vmem>>, vector<8x128xf32>
      tpu.vector_store %arg7[%c0_11, %c0_12], %12 {strides = array<i32>} : memref<8x128xf32, #tpu.memory_space<vmem>>, vector<8x128xf32>,
    } else {
    }
    %c0 = arith.constant 0 : index
    %c0_1 = arith.constant 0 : index
    %3 = vector.load %arg7[%c0, %c0_1] : memref<8x128xf32, #tpu.memory_space<vmem>>, vector<8x128xf32>
    %c0_2 = arith.constant 0 : index
    %c0_3 = arith.constant 0 : index
    %4 = vector.load %arg3[%c0_2, %c0_3] : memref<8x128xf32, #tpu.memory_space<vmem>>, vector<8x128xf32>
    %c0_4 = arith.constant 0 : index
    %c0_5 = arith.constant 0 : index
    %5 = vector.load %arg4[%c0_4, %c0_5] : memref<128x128xf32, #tpu.memory_space<vmem>>, vector<128x128xf32>
    %cst = arith.constant dense<0.000000e+00> : vector<8x128xf32>
    %6 = tpu.matmul %4, %5, %cst {dimension_numbers = #tpu.dot_dimension_numbers<[1], [0], [0], [1], [0, 0, 1, 1], [], []>} : vector<8x128xf32>, vector<128x128xf32>, vector<8x128xf32> -> vector<8x128xf32>
    %7 = arith.addf %3, %6 : vector<8x128xf32>
    %c0_6 = arith.constant 0 : index
    %c0_7 = arith.constant 0 : index
    %8 = vector.load %arg7[%c0_6, %c0_7] : memref<8x128xf32, #tpu.memory_space<vmem>>, vector<8x128xf32>
    tpu.vector_store %arg7[%c0_6, %c0_7], %7 {strides = array<i32>} : memref<8x128xf32, #tpu.memory_space<vmem>>, vector<8x128xf32>,
    %c0_i32_8 = arith.constant 0 : i32
    %9 = arith.cmpi eq, %arg2, %c0_i32_8 : i32
    %10 = arith.extui %9 : i1 to i32
    %c0_i32_9 = arith.constant 0 : i32
    %11 = arith.cmpi ne, %10, %c0_i32_9 : i32
    scf.if %11 {
      %c0_10 = arith.constant 0 : index
      %c0_11 = arith.constant 0 : index
      %12 = vector.load %arg7[%c0_10, %c0_11] : memref<8x128xf32, #tpu.memory_space<vmem>>, vector<8x128xf32>
      %cst_12 = arith.constant 0.176776692 : f32
      %13 = vector.broadcast %cst_12 : f32 to vector<8x128xf32>
      %14 = arith.mulf %12, %13 : vector<8x128xf32>
      %c0_13 = arith.constant 0 : index
      %c0_14 = arith.constant 0 : index
      %15 = vector.load %arg5[%c0_13, %c0_14] : memref<1x128xf32, #tpu.memory_space<vmem>>, vector<1x128xf32>
      %16 = vector.broadcast %15 : vector<1x128xf32> to vector<8x128xf32>
      %17 = arith.addf %14, %16 : vector<8x128xf32>
      %c0_15 = arith.constant 0 : index
      %c0_16 = arith.constant 0 : index
      %18 = vector.load %arg6[%c0_15, %c0_16] : memref<8x128xf32, #tpu.memory_space<vmem>>, vector<8x128xf32>
      tpu.vector_store %arg6[%c0_15, %c0_16], %17 {strides = array<i32>} : memref<8x128xf32, #tpu.memory_space<vmem>>, vector<8x128xf32>,
    } else {
    }
    return
  }
  func.func @transform_0(%arg0: i32, %arg1: i32, %arg2: i32) -> (i32, i32) {
    %c0_i32 = arith.constant 0 : i32
    return %arg0, %arg2 : i32, i32
  }
  func.func @transform_1(%arg0: i32, %arg1: i32, %arg2: i32) -> (i32, i32) {
    %c0_i32 = arith.constant 0 : i32
    return %arg2, %arg1 : i32, i32
  }
  func.func @transform_2(%arg0: i32, %arg1: i32, %arg2: i32) -> (i32, i32) {
    %c0_i32 = arith.constant 0 : i32
    %c0_i32_0 = arith.constant 0 : i32
    return %c0_i32, %arg1 : i32, i32
  }
  func.func @transform_3(%arg0: i32, %arg1: i32, %arg2: i32) -> (i32, i32) {
    %c0_i32 = arith.constant 0 : i32
    return %arg0, %arg1 : i32, i32
  }
}

</mosaic_0001>

<llo_original>
// kernel: tpu_custom_call.1
$region0: #{tpu_custom_call.1}
  #allocation0 [shape = 'u32[]', space=smem, size = 0x4, offset = 0x4, fixed_abs, tag = 'smem constant byte address 0x4 - core index']
  #allocation1 [shape = 'u32[72,128]{1,0:T(1,128)}', space=vmem, size = 0x9000, scoped, tag = 'internal scratch']
  #allocation2 [shape = 'f32[8,128]{1,0:T(8,128)}', space=vmem, size = 0x1000, scoped, tag = 'scratch operand']
  %s0 = inlined_call_operand.hbm [shape: f32[8,128], index: 0, kind: input, shape index: {}]
  %s1 = inlined_call_operand.hbm [shape: f32[128,128], index: 1, kind: input, shape index: {}]
  %s2 = inlined_call_operand.vmem [shape: f32[1,128], index: 2, kind: input, shape index: {}]
  %s3 = inlined_call_operand.hbm [shape: f32[8,128], index: 3, kind: output, shape index: {}]
  %s4 = sld [smem:[#allocation0]]
  $region38: #{tpu_custom_call.1} parent=0
    _
  %s6 = ssub.s32 1, %s4
  %s7 = scalar_select 0, %s6, %s4
  $region1: #{tpu_custom_call.1} parent=0
    #allocation3 [shape = 'u8[4096]{0}', space=vmem, size = 0x1000, scoped, tag = 'input window, operand 0, single buffered']
    #allocation4 [shape = 's32[1]{0}', space=sflag, size = 0x4, scoped, tag = 'scoped memory for tpu_custom_call.1']
    #allocation5 [shape = 's32[1]{0}', space=sflag, size = 0x4, scoped, tag = 'scoped memory for tpu_custom_call.1']
    #allocation6 [shape = 'u8[65536]{0}', space=vmem, size = 0x10000, scoped, tag = 'input window, operand 1, single buffered']
    #allocation7 [shape = 's32[1]{0}', space=sflag, size = 0x4, scoped, tag = 'scoped memory for tpu_custom_call.1']
    #allocation8 [shape = 'u8[4096]{0}', space=vmem, size = 0x1000, scoped, tag = 'output window, operand 0, single buffered']
    %8 = vsyncpa [#allocation4], 0
    %9 = vsyncpa [#allocation7], 0
    %10 = vsyncpa [#allocation5], 0
    // Predicated region
    $region2: #{tpu_custom_call.1} parent=1 // pred_check
      _
    $region3: #{tpu_custom_call.1} parent=1 // pred_check_branch
      %12 = sbr.rel (0) target = $region5
    $region4: #{tpu_custom_call.1} parent=1 // pred_region
      %14 = vsyncadd [#allocation4], 0
      %s16 = sshll.u32 %s0, 4
      %s17 = int_to_ptr.hbm [resolvable:$true] %s16
      %s18 = sshll.u32 [#allocation3], 4
      %s19 = int_to_ptr.vmem [resolvable:$true] %s18
      %21 = dma.hbm_to_vmem [thread:$0]  %s17, 128, %s19, [#allocation4]
    $region5: #{tpu_custom_call.1} parent=1 // pred_fallthru
      _
    // Predicated region
    $region6: #{tpu_custom_call.1} parent=1 // pred_check
      _
    $region7: #{tpu_custom_call.1} parent=1 // pred_check_branch
      %23 = sbr.rel (0) target = $region9
    $region8: #{tpu_custom_call.1} parent=1 // pred_region
      %25 = vsyncadd [#allocation7], 0
      %s26 = sshll.u32 %s1, 4
      %s27 = int_to_ptr.hbm [resolvable:$true] %s26
      %s28 = sshll.u32 [#allocation6], 4
      %s29 = int_to_ptr.vmem [resolvable:$true] %s28
      %34 = dma.hbm_to_vmem [thread:$0]  %s27, 2048, %s29, [#allocation7], 128, 128, 8
    $region9: #{tpu_custom_call.1} parent=1 // pred_fallthru
      _
    // Predicated region
    $region10: #{tpu_custom_call.1} parent=1 // pred_check
      _
    $region11: #{tpu_custom_call.1} parent=1 // pred_check_branch
      %36 = sbr.rel (0) target = $region13
    $region12: #{tpu_custom_call.1} parent=1 // pred_region
      _
    $region13: #{tpu_custom_call.1} parent=1 // pred_fallthru
      _
    // Predicated region
    $region14: #{tpu_custom_call.1} parent=1 // pred_check
      _
    $region15: #{tpu_custom_call.1} parent=1 // pred_check_branch
      %38 = sbr.rel (0) target = $region17
    $region16: #{tpu_custom_call.1} parent=1 // pred_region
      %40 = dma.done [#allocation4], 128
    $region17: #{tpu_custom_call.1} parent=1 // pred_fallthru
      _
    // Predicated region
    $region18: #{tpu_custom_call.1} parent=1 // pred_check
      _
    $region19: #{tpu_custom_call.1} parent=1 // pred_check_branch
      %42 = sbr.rel (0) target = $region21
    $region20: #{tpu_custom_call.1} parent=1 // pred_region
      %44 = dma.done [#allocation7], 2048
    $region21: #{tpu_custom_call.1} parent=1 // pred_fallthru
      _
    %p45 = scmp.eq.s32.totalorder 0, 0
    // Predicated region
    $region22: #{tpu_custom_call.1} parent=1 // pred_check
      %p46 = pneg %p45
    $region23: #{tpu_custom_call.1} parent=1 // pred_check_branch
      %48 = sbr.rel (%p46) target = $region25
    $region24: #{tpu_custom_call.1} parent=1 // pred_region
      %49 = vst [vmem:[#allocation2] sm:$0xff] 0.0
    $region25: #{tpu_custom_call.1} parent=1 // pred_fallthru
      _
    %v50 = vld [vmem:[#allocation2] sm:$0xff]
    %v51 = vld [vmem:[#allocation3] sm:$0xff]
    %v52 = vld [vmem:[#allocation6] sm:$0xff]
    %v53 = vld [vmem:[#allocation6 + $0x8] sm:$0xff]
    %v54 = vld [vmem:[#allocation6 + $0x10] sm:$0xff]
    %v55 = vld [vmem:[#allocation6 + $0x18] sm:$0xff]
    %v56 = vld [vmem:[#allocation6 + $0x20] sm:$0xff]
    %v57 = vld [vmem:[#allocation6 + $0x28] sm:$0xff]
    %v58 = vld [vmem:[#allocation6 + $0x30] sm:$0xff]
    %v59 = vld [vmem:[#allocation6 + $0x38] sm:$0xff]
    %v60 = vld [vmem:[#allocation6 + $0x40] sm:$0xff]
    %v61 = vld [vmem:[#allocation6 + $0x48] sm:$0xff]
    %v62 = vld [vmem:[#allocation6 + $0x50] sm:$0xff]
    %v63 = vld [vmem:[#allocation6 + $0x58] sm:$0xff]
    %v64 = vld [vmem:[#allocation6 + $0x60] sm:$0xff]
    %v65 = vld [vmem:[#allocation6 + $0x68] sm:$0xff]
    %v66 = vld [vmem:[#allocation6 + $0x70] sm:$0xff]
    %v67 = vld [vmem:[#allocation6 + $0x78] sm:$0xff]
    %68 = vmatpush.msra.mxu0 %v67
    %69 = vmatpush.msra.mxu0 %v66
    %70 = vmatpush.msra.mxu0 %v65
    %71 = vmatpush.msra.mxu0 %v64
    %72 = vmatpush.msra.mxu0 %v63
    %73 = vmatpush.msra.mxu0 %v62
    %74 = vmatpush.msra.mxu0 %v61
    %75 = vmatpush.msra.mxu0 %v60
    %76 = vmatpush.msra.mxu0 %v59
    %77 = vmatpush.msra.mxu0 %v58
    %78 = vmatpush.msra.mxu0 %v57
    %79 = vmatpush.msra.mxu0 %v56
    %80 = vmatpush.msra.mxu0 %v55
    %81 = vmatpush.msra.mxu0 %v54
    %82 = vmatpush.msra.mxu0 %v53
    %83 = vmatpush.msra.mxu0 %v52
    %84 = vmatmul.f32.gmra.mxu0 %v51
    %v85 = vpop.f32.mrf.mxu0
    %v86 = vadd.f32 0.0, %v85
    %87 = vdwg.mxu0
    %v88 = vadd.f32 %v50, %v86
    %89 = vst [vmem:[#allocation2] sm:$0xff] %v88
    // Predicated region
    $region26: #{tpu_custom_call.1} parent=1 // pred_check
      %p90 = pneg %p45
    $region27: #{tpu_custom_call.1} parent=1 // pred_check_branch
      %92 = sbr.rel (%p90) target = $region29
    $region28: #{tpu_custom_call.1} parent=1 // pred_region
      %v93 = vld [vmem:[#allocation2] sm:$0xff]
      %v94 = vmul.f32 %v93, 0.17677669
      %v95 = vld [vmem:[%s2] sm:$0x1]
      %v97 = vperm.slane %v95, 0
      %v99 = vadd.f32 %v94, %v97
      %100 = vst [vmem:[#allocation8] sm:$0xff] %v99
    $region29: #{tpu_custom_call.1} parent=1 // pred_fallthru
      _
    // Predicated region
    $region30: #{tpu_custom_call.1} parent=1 // pred_check
      _
    $region31: #{tpu_custom_call.1} parent=1 // pred_check_branch
      %102 = sbr.rel (0) target = $region33
    $region32: #{tpu_custom_call.1} parent=1 // pred_region
      %104 = vsyncadd [#allocation5], 0
      %s106 = sshll.u32 [#allocation8], 4
      %s107 = int_to_ptr.vmem [resolvable:$true] %s106
      %s108 = sshll.u32 %s3, 4
      %s109 = int_to_ptr.hbm [resolvable:$true] %s108
      %111 = dma.vmem_to_hbm [thread:$0]  %s107, 128, %s109, [#allocation5]
    $region33: #{tpu_custom_call.1} parent=1 // pred_fallthru
      _
    // Predicated region
    $region34: #{tpu_custom_call.1} parent=1 // pred_check
      _
    $region35: #{tpu_custom_call.1} parent=1 // pred_check_branch
      %113 = sbr.rel (0) target = $region37
    $region36: #{tpu_custom_call.1} parent=1 // pred_region
      %115 = dma.done [#allocation5], 128
    $region37: #{tpu_custom_call.1} parent=1 // pred_fallthru
      _
    %116 = vsyncpa [#allocation4], 1
    %117 = vsyncpa [#allocation7], 1
    %118 = vsyncpa [#allocation5], 1

</llo_original>
